<compile_context>
chip_gen: v5e
topology: v5e:2x2
jax: 0.10.0
libtpu: 0.0.40
codegen_flags: <defaults>
</compile_context>

<pallas_src>
import jax
import jax.numpy as jnp
from jax.experimental import pallas as pl
from jax.experimental.pallas import tpu as pltpu

N_SINGLE = 4
N_DOUBLE = 1
N_FUNCS = N_SINGLE + N_DOUBLE        # = 5  (layer output width)
LAYER_OUT = N_FUNCS + N_DOUBLE       # = 6  (layer matmul width)
LANE = 128                           # vreg lane width


def _apply_symbolic_funcs_planes(y):
    """y: list of LAYER_OUT (rows, 128) planes -> list of N_FUNCS planes.

    Same column -> function mapping as SymbolicLayer.forward:
      identity, sin, cos, sigmoid (single-input), multiply (double-input).
    Everything is a whole-plane elementwise op (VPU/EUP), no lane shuffles.
    """
    return [
        y[0],                    # identity
        jnp.sin(y[1]),           # sin
        jnp.cos(y[2]),           # cos
        jax.nn.sigmoid(y[3]),    # sigmoid
        y[4] * y[5],             # multiply (double-input)
    ]


def symbolic_nn_kernel(w0_ref, w1_ref, wout_ref, x_ref, o_ref):
    # Weights are scalars in SMEM; each read broadcasts into a vreg and drives
    # a VPU FMA over the full (tile_rows, 128) batch plane. No MXU round-trips.
    x0 = x_ref[...]                                           # (TR, 128) f32

    # --- hidden layer 0: in_features = 1 ---------------------------------
    y = [w0_ref[0, j] * x0 for j in range(LAYER_OUT)]         # 6 planes
    z = _apply_symbolic_funcs_planes(y)                       # 5 planes

    # --- hidden layer 1: in_features = 5 ---------------------------------
    y = []
    for j in range(LAYER_OUT):
        acc = w1_ref[0, j] * z[0]
        for k in range(1, N_FUNCS):
            acc = acc + w1_ref[k, j] * z[k]
        y.append(acc)
    z = _apply_symbolic_funcs_planes(y)                       # 5 planes

    # --- output projection: (5, 1) ---------------------------------------
    out = wout_ref[0, 0] * z[0]
    for k in range(1, N_FUNCS):
        out = out + wout_ref[k, 0] * z[k]
    o_ref[...] = out                                          # lane-dense store


def symbolic_nn_forward(x, w0, w1, w_out, *, tile_rows=256):
    """x: (B, 1) f32 -> (B, 1) f32.  Handles ragged B by zero-padding."""
    assert x.ndim == 2 and x.shape[1] == 1, "network input width is 1"
    B = x.shape[0]
    elems_per_tile = tile_rows * LANE
    n_tiles = max(1, -(-B // elems_per_tile))     # ceil-div, ragged batches OK
    padded = n_tiles * elems_per_tile

    x_flat = x.reshape(-1).astype(jnp.float32)
    if padded != B:
        x_flat = jnp.pad(x_flat, (0, padded - B))
    x2 = x_flat.reshape(n_tiles * tile_rows, LANE)            # batch fills lanes

    out2 = pl.pallas_call(
        symbolic_nn_kernel,
        out_shape=jax.ShapeDtypeStruct((n_tiles * tile_rows, LANE), jnp.float32),
        grid=(n_tiles,),
        in_specs=[
            pl.BlockSpec(memory_space=pltpu.MemorySpace.SMEM),    # w0  (1, 6)
            pl.BlockSpec(memory_space=pltpu.MemorySpace.SMEM),    # w1  (5, 6)
            pl.BlockSpec(memory_space=pltpu.MemorySpace.SMEM),    # w_out (5, 1)
            pl.BlockSpec((tile_rows, LANE), lambda i: (i, 0)),    # batch-tiled x
        ],
        out_specs=pl.BlockSpec((tile_rows, LANE), lambda i: (i, 0)),
        compiler_params=pltpu.CompilerParams(
            dimension_semantics=("parallel",)),
    )(w0.astype(jnp.float32), w1.astype(jnp.float32),
      w_out.astype(jnp.float32), x2)

    return out2.reshape(padded, 1)[:B]


def _apply_symbolic_funcs_ref(y):
    cols = [
        y[:, 0:1],
        jnp.sin(y[:, 1:2]),
        jnp.cos(y[:, 2:3]),
        jax.nn.sigmoid(y[:, 3:4]),
        y[:, 4:5] * y[:, 5:6],
    ]
    return jnp.concatenate(cols, axis=1)


def symbolic_nn_reference(x, w0, w1, w_out):
    """Pure-JAX reference of the same forward pass (for validation)."""
    z = _apply_symbolic_funcs_ref(x @ w0)
    z = _apply_symbolic_funcs_ref(z @ w1)
    return z @ w_out


if __name__ == "__main__":
    key = jax.random.PRNGKey(0)
    k_x, k_w0, k_w1, k_out = jax.random.split(key, 4)

    B = 5000          # deliberately ragged (not a multiple of tile*128)
    init_std = 0.1    # SymbolicLayer init_std

    # SymbolicNN parameter shapes: n_layer_inp = [1, 5, 5]
    x = jax.random.normal(k_x, (B, 1), dtype=jnp.float32)
    w0 = init_std * jax.random.normal(k_w0, (1, LAYER_OUT), dtype=jnp.float32)
    w1 = init_std * jax.random.normal(k_w1, (N_FUNCS, LAYER_OUT), dtype=jnp.float32)
    w_out = jax.random.normal(k_out, (N_FUNCS, 1), dtype=jnp.float32)

    ref = symbolic_nn_reference(x, w0, w1, w_out)

    # Small tiles -> multi-step grid; default tiles -> performance path.
    out_small = jax.block_until_ready(
        symbolic_nn_forward(x, w0, w1, w_out, tile_rows=8))
    out_big = jax.block_until_ready(
        symbolic_nn_forward(x, w0, w1, w_out))     # tile_rows=256 default

    assert out_small.shape == (B, 1) and out_big.shape == (B, 1)
    assert jnp.allclose(out_small, ref, atol=1e-5, rtol=1e-5), "mismatch (small tiles)"
    assert jnp.allclose(out_big, ref, atol=1e-5, rtol=1e-5), "mismatch (default tiles)"

    print("KERNEL_OK")
</pallas_src>

<mosaic_0001>
module attributes {stable_mosaic.version = 11 : i64} {
  func.func @symbolic_nn_kernel(%arg0: i32, %arg1: memref<1x6xf32, #tpu.memory_space<smem>>, %arg2: memref<5x6xf32, #tpu.memory_space<smem>>, %arg3: memref<5x1xf32, #tpu.memory_space<smem>>, %arg4: memref<8x128xf32, #tpu.memory_space<vmem>>, %arg5: memref<8x128xf32, #tpu.memory_space<vmem>>) attributes {dimension_semantics = [#tpu.dimension_semantics<parallel>], iteration_bounds = array<i64: 5>, scalar_prefetch = 0 : i64, scratch_operands = 0 : i64, tpu.core_type = #tpu.core_type<tc>, window_params = [{transform_indices = @transform_0, window_bounds = array<i64: 1, 6>}, {transform_indices = @transform_1, window_bounds = array<i64: 5, 6>}, {transform_indices = @transform_2, window_bounds = array<i64: 5, 1>}, {transform_indices = @transform_3, window_bounds = array<i64: 8, 128>}, {transform_indices = @transform_4, window_bounds = array<i64: 8, 128>}]} {
    %c0 = arith.constant 0 : index
    %c0_0 = arith.constant 0 : index
    %0 = vector.load %arg4[%c0, %c0_0] : memref<8x128xf32, #tpu.memory_space<vmem>>, vector<8x128xf32>
    %c0_1 = arith.constant 0 : index
    %c0_2 = arith.constant 0 : index
    %1 = memref.load %arg1[%c0_1, %c0_2] : memref<1x6xf32, #tpu.memory_space<smem>>
    %2 = vector.broadcast %1 : f32 to vector<8x128xf32>
    %3 = arith.mulf %2, %0 : vector<8x128xf32>
    %c0_3 = arith.constant 0 : index
    %c1 = arith.constant 1 : index
    %4 = memref.load %arg1[%c0_3, %c1] : memref<1x6xf32, #tpu.memory_space<smem>>
    %5 = vector.broadcast %4 : f32 to vector<8x128xf32>
    %6 = arith.mulf %5, %0 : vector<8x128xf32>
    %c0_4 = arith.constant 0 : index
    %c2 = arith.constant 2 : index
    %7 = memref.load %arg1[%c0_4, %c2] : memref<1x6xf32, #tpu.memory_space<smem>>
    %8 = vector.broadcast %7 : f32 to vector<8x128xf32>
    %9 = arith.mulf %8, %0 : vector<8x128xf32>
    %c0_5 = arith.constant 0 : index
    %c3 = arith.constant 3 : index
    %10 = memref.load %arg1[%c0_5, %c3] : memref<1x6xf32, #tpu.memory_space<smem>>
    %11 = vector.broadcast %10 : f32 to vector<8x128xf32>
    %12 = arith.mulf %11, %0 : vector<8x128xf32>
    %c0_6 = arith.constant 0 : index
    %c4 = arith.constant 4 : index
    %13 = memref.load %arg1[%c0_6, %c4] : memref<1x6xf32, #tpu.memory_space<smem>>
    %14 = vector.broadcast %13 : f32 to vector<8x128xf32>
    %15 = arith.mulf %14, %0 : vector<8x128xf32>
    %c0_7 = arith.constant 0 : index
    %c5 = arith.constant 5 : index
    %16 = memref.load %arg1[%c0_7, %c5] : memref<1x6xf32, #tpu.memory_space<smem>>
    %17 = vector.broadcast %16 : f32 to vector<8x128xf32>
    %18 = arith.mulf %17, %0 : vector<8x128xf32>
    %19 = math.sin %6 : vector<8x128xf32>
    %20 = math.cos %9 : vector<8x128xf32>
    %21 = arith.negf %12 : vector<8x128xf32>
    %22 = math.exp %21 : vector<8x128xf32>
    %cst = arith.constant 1.000000e+00 : f32
    %23 = vector.broadcast %cst : f32 to vector<8x128xf32>
    %24 = arith.addf %23, %22 : vector<8x128xf32>
    %25 = arith.divf %23, %24 : vector<8x128xf32>
    %26 = arith.mulf %15, %18 : vector<8x128xf32>
    %c0_8 = arith.constant 0 : index
    %c0_9 = arith.constant 0 : index
    %27 = memref.load %arg2[%c0_8, %c0_9] : memref<5x6xf32, #tpu.memory_space<smem>>
    %28 = vector.broadcast %27 : f32 to vector<8x128xf32>
    %29 = arith.mulf %28, %3 : vector<8x128xf32>
    %c1_10 = arith.constant 1 : index
    %c0_11 = arith.constant 0 : index
    %30 = memref.load %arg2[%c1_10, %c0_11] : memref<5x6xf32, #tpu.memory_space<smem>>
    %31 = vector.broadcast %30 : f32 to vector<8x128xf32>
    %32 = arith.mulf %31, %19 : vector<8x128xf32>
    %33 = arith.addf %29, %32 : vector<8x128xf32>
    %c2_12 = arith.constant 2 : index
    %c0_13 = arith.constant 0 : index
    %34 = memref.load %arg2[%c2_12, %c0_13] : memref<5x6xf32, #tpu.memory_space<smem>>
    %35 = vector.broadcast %34 : f32 to vector<8x128xf32>
    %36 = arith.mulf %35, %20 : vector<8x128xf32>
    %37 = arith.addf %33, %36 : vector<8x128xf32>
    %c3_14 = arith.constant 3 : index
    %c0_15 = arith.constant 0 : index
    %38 = memref.load %arg2[%c3_14, %c0_15] : memref<5x6xf32, #tpu.memory_space<smem>>
    %39 = vector.broadcast %38 : f32 to vector<8x128xf32>
    %40 = arith.mulf %39, %25 : vector<8x128xf32>
    %41 = arith.addf %37, %40 : vector<8x128xf32>
    %c4_16 = arith.constant 4 : index
    %c0_17 = arith.constant 0 : index
    %42 = memref.load %arg2[%c4_16, %c0_17] : memref<5x6xf32, #tpu.memory_space<smem>>
    %43 = vector.broadcast %42 : f32 to vector<8x128xf32>
    %44 = arith.mulf %43, %26 : vector<8x128xf32>
    %45 = arith.addf %41, %44 : vector<8x128xf32>
    %c0_18 = arith.constant 0 : index
    %c1_19 = arith.constant 1 : index
    %46 = memref.load %arg2[%c0_18, %c1_19] : memref<5x6xf32, #tpu.memory_space<smem>>
    %47 = vector.broadcast %46 : f32 to vector<8x128xf32>
    %48 = arith.mulf %47, %3 : vector<8x128xf32>
    %c1_20 = arith.constant 1 : index
    %c1_21 = arith.constant 1 : index
    %49 = memref.load %arg2[%c1_20, %c1_21] : memref<5x6xf32, #tpu.memory_space<smem>>
    %50 = vector.broadcast %49 : f32 to vector<8x128xf32>
    %51 = arith.mulf %50, %19 : vector<8x128xf32>
    %52 = arith.addf %48, %51 : vector<8x128xf32>
    %c2_22 = arith.constant 2 : index
    %c1_23 = arith.constant 1 : index
    %53 = memref.load %arg2[%c2_22, %c1_23] : memref<5x6xf32, #tpu.memory_space<smem>>
    %54 = vector.broadcast %53 : f32 to vector<8x128xf32>
    %55 = arith.mulf %54, %20 : vector<8x128xf32>
    %56 = arith.addf %52, %55 : vector<8x128xf32>
    %c3_24 = arith.constant 3 : index
    %c1_25 = arith.constant 1 : index
    %57 = memref.load %arg2[%c3_24, %c1_25] : memref<5x6xf32, #tpu.memory_space<smem>>
    %58 = vector.broadcast %57 : f32 to vector<8x128xf32>
    %59 = arith.mulf %58, %25 : vector<8x128xf32>
    %60 = arith.addf %56, %59 : vector<8x128xf32>
    %c4_26 = arith.constant 4 : index
    %c1_27 = arith.constant 1 : index
    %61 = memref.load %arg2[%c4_26, %c1_27] : memref<5x6xf32, #tpu.memory_space<smem>>
    %62 = vector.broadcast %61 : f32 to vector<8x128xf32>
    %63 = arith.mulf %62, %26 : vector<8x128xf32>
    %64 = arith.addf %60, %63 : vector<8x128xf32>
    %c0_28 = arith.constant 0 : index
    %c2_29 = arith.constant 2 : index
    %65 = memref.load %arg2[%c0_28, %c2_29] : memref<5x6xf32, #tpu.memory_space<smem>>
    %66 = vector.broadcast %65 : f32 to vector<8x128xf32>
    %67 = arith.mulf %66, %3 : vector<8x128xf32>
    %c1_30 = arith.constant 1 : index
    %c2_31 = arith.constant 2 : index
    %68 = memref.load %arg2[%c1_30, %c2_31] : memref<5x6xf32, #tpu.memory_space<smem>>
    %69 = vector.broadcast %68 : f32 to vector<8x128xf32>
    %70 = arith.mulf %69, %19 : vector<8x128xf32>
    %71 = arith.addf %67, %70 : vector<8x128xf32>
    %c2_32 = arith.constant 2 : index
    %c2_33 = arith.constant 2 : index
    %72 = memref.load %arg2[%c2_32, %c2_33] : memref<5x6xf32, #tpu.memory_space<smem>>
    %73 = vector.broadcast %72 : f32 to vector<8x128xf32>
    %74 = arith.mulf %73, %20 : vector<8x128xf32>
    %75 = arith.addf %71, %74 : vector<8x128xf32>
    %c3_34 = arith.constant 3 : index
    %c2_35 = arith.constant 2 : index
    %76 = memref.load %arg2[%c3_34, %c2_35] : memref<5x6xf32, #tpu.memory_space<smem>>
    %77 = vector.broadcast %76 : f32 to vector<8x128xf32>
    %78 = arith.mulf %77, %25 : vector<8x128xf32>
    %79 = arith.addf %75, %78 : vector<8x128xf32>
    %c4_36 = arith.constant 4 : index
    %c2_37 = arith.constant 2 : index
    %80 = memref.load %arg2[%c4_36, %c2_37] : memref<5x6xf32, #tpu.memory_space<smem>>
    %81 = vector.broadcast %80 : f32 to vector<8x128xf32>
    %82 = arith.mulf %81, %26 : vector<8x128xf32>
    %83 = arith.addf %79, %82 : vector<8x128xf32>
    %c0_38 = arith.constant 0 : index
    %c3_39 = arith.constant 3 : index
    %84 = memref.load %arg2[%c0_38, %c3_39] : memref<5x6xf32, #tpu.memory_space<smem>>
    %85 = vector.broadcast %84 : f32 to vector<8x128xf32>
    %86 = arith.mulf %85, %3 : vector<8x128xf32>
    %c1_40 = arith.constant 1 : index
    %c3_41 = arith.constant 3 : index
    %87 = memref.load %arg2[%c1_40, %c3_41] : memref<5x6xf32, #tpu.memory_space<smem>>
    %88 = vector.broadcast %87 : f32 to vector<8x128xf32>
    %89 = arith.mulf %88, %19 : vector<8x128xf32>
    %90 = arith.addf %86, %89 : vector<8x128xf32>
    %c2_42 = arith.constant 2 : index
    %c3_43 = arith.constant 3 : index
    %91 = memref.load %arg2[%c2_42, %c3_43] : memref<5x6xf32, #tpu.memory_space<smem>>
    %92 = vector.broadcast %91 : f32 to vector<8x128xf32>
    %93 = arith.mulf %92, %20 : vector<8x128xf32>
    %94 = arith.addf %90, %93 : vector<8x128xf32>
    %c3_44 = arith.constant 3 : index
    %c3_45 = arith.constant 3 : index
    %95 = memref.load %arg2[%c3_44, %c3_45] : memref<5x6xf32, #tpu.memory_space<smem>>
    %96 = vector.broadcast %95 : f32 to vector<8x128xf32>
    %97 = arith.mulf %96, %25 : vector<8x128xf32>
    %98 = arith.addf %94, %97 : vector<8x128xf32>
    %c4_46 = arith.constant 4 : index
    %c3_47 = arith.constant 3 : index
    %99 = memref.load %arg2[%c4_46, %c3_47] : memref<5x6xf32, #tpu.memory_space<smem>>
    %100 = vector.broadcast %99 : f32 to vector<8x128xf32>
    %101 = arith.mulf %100, %26 : vector<8x128xf32>
    %102 = arith.addf %98, %101 : vector<8x128xf32>
    %c0_48 = arith.constant 0 : index
    %c4_49 = arith.constant 4 : index
    %103 = memref.load %arg2[%c0_48, %c4_49] : memref<5x6xf32, #tpu.memory_space<smem>>
    %104 = vector.broadcast %103 : f32 to vector<8x128xf32>
    %105 = arith.mulf %104, %3 : vector<8x128xf32>
    %c1_50 = arith.constant 1 : index
    %c4_51 = arith.constant 4 : index
    %106 = memref.load %arg2[%c1_50, %c4_51] : memref<5x6xf32, #tpu.memory_space<smem>>
    %107 = vector.broadcast %106 : f32 to vector<8x128xf32>
    %108 = arith.mulf %107, %19 : vector<8x128xf32>
    %109 = arith.addf %105, %108 : vector<8x128xf32>
    %c2_52 = arith.constant 2 : index
    %c4_53 = arith.constant 4 : index
    %110 = memref.load %arg2[%c2_52, %c4_53] : memref<5x6xf32, #tpu.memory_space<smem>>
    %111 = vector.broadcast %110 : f32 to vector<8x128xf32>
    %112 = arith.mulf %111, %20 : vector<8x128xf32>
    %113 = arith.addf %109, %112 : vector<8x128xf32>
    %c3_54 = arith.constant 3 : index
    %c4_55 = arith.constant 4 : index
    %114 = memref.load %arg2[%c3_54, %c4_55] : memref<5x6xf32, #tpu.memory_space<smem>>
    %115 = vector.broadcast %114 : f32 to vector<8x128xf32>
    %116 = arith.mulf %115, %25 : vector<8x128xf32>
    %117 = arith.addf %113, %116 : vector<8x128xf32>
    %c4_56 = arith.constant 4 : index
    %c4_57 = arith.constant 4 : index
    %118 = memref.load %arg2[%c4_56, %c4_57] : memref<5x6xf32, #tpu.memory_space<smem>>
    %119 = vector.broadcast %118 : f32 to vector<8x128xf32>
    %120 = arith.mulf %119, %26 : vector<8x128xf32>
    %121 = arith.addf %117, %120 : vector<8x128xf32>
    %c0_58 = arith.constant 0 : index
    %c5_59 = arith.constant 5 : index
    %122 = memref.load %arg2[%c0_58, %c5_59] : memref<5x6xf32, #tpu.memory_space<smem>>
    %123 = vector.broadcast %122 : f32 to vector<8x128xf32>
    %124 = arith.mulf %123, %3 : vector<8x128xf32>
    %c1_60 = arith.constant 1 : index
    %c5_61 = arith.constant 5 : index
    %125 = memref.load %arg2[%c1_60, %c5_61] : memref<5x6xf32, #tpu.memory_space<smem>>
    %126 = vector.broadcast %125 : f32 to vector<8x128xf32>
    %127 = arith.mulf %126, %19 : vector<8x128xf32>
    %128 = arith.addf %124, %127 : vector<8x128xf32>
    %c2_62 = arith.constant 2 : index
    %c5_63 = arith.constant 5 : index
    %129 = memref.load %arg2[%c2_62, %c5_63] : memref<5x6xf32, #tpu.memory_space<smem>>
    %130 = vector.broadcast %129 : f32 to vector<8x128xf32>
    %131 = arith.mulf %130, %20 : vector<8x128xf32>
    %132 = arith.addf %128, %131 : vector<8x128xf32>
    %c3_64 = arith.constant 3 : index
    %c5_65 = arith.constant 5 : index
    %133 = memref.load %arg2[%c3_64, %c5_65] : memref<5x6xf32, #tpu.memory_space<smem>>
    %134 = vector.broadcast %133 : f32 to vector<8x128xf32>
    %135 = arith.mulf %134, %25 : vector<8x128xf32>
    %136 = arith.addf %132, %135 : vector<8x128xf32>
    %c4_66 = arith.constant 4 : index
    %c5_67 = arith.constant 5 : index
    %137 = memref.load %arg2[%c4_66, %c5_67] : memref<5x6xf32, #tpu.memory_space<smem>>
    %138 = vector.broadcast %137 : f32 to vector<8x128xf32>
    %139 = arith.mulf %138, %26 : vector<8x128xf32>
    %140 = arith.addf %136, %139 : vector<8x128xf32>
    %141 = math.sin %64 : vector<8x128xf32>
    %142 = math.cos %83 : vector<8x128xf32>
    %143 = arith.negf %102 : vector<8x128xf32>
    %144 = math.exp %143 : vector<8x128xf32>
    %cst_68 = arith.constant 1.000000e+00 : f32
    %145 = vector.broadcast %cst_68 : f32 to vector<8x128xf32>
    %146 = arith.addf %145, %144 : vector<8x128xf32>
    %147 = arith.divf %145, %146 : vector<8x128xf32>
    %148 = arith.mulf %121, %140 : vector<8x128xf32>
    %c0_69 = arith.constant 0 : index
    %c0_70 = arith.constant 0 : index
    %149 = memref.load %arg3[%c0_69, %c0_70] : memref<5x1xf32, #tpu.memory_space<smem>>
    %150 = vector.broadcast %149 : f32 to vector<8x128xf32>
    %151 = arith.mulf %150, %45 : vector<8x128xf32>
    %c1_71 = arith.constant 1 : index
    %c0_72 = arith.constant 0 : index
    %152 = memref.load %arg3[%c1_71, %c0_72] : memref<5x1xf32, #tpu.memory_space<smem>>
    %153 = vector.broadcast %152 : f32 to vector<8x128xf32>
    %154 = arith.mulf %153, %141 : vector<8x128xf32>
    %155 = arith.addf %151, %154 : vector<8x128xf32>
    %c2_73 = arith.constant 2 : index
    %c0_74 = arith.constant 0 : index
    %156 = memref.load %arg3[%c2_73, %c0_74] : memref<5x1xf32, #tpu.memory_space<smem>>
    %157 = vector.broadcast %156 : f32 to vector<8x128xf32>
    %158 = arith.mulf %157, %142 : vector<8x128xf32>
    %159 = arith.addf %155, %158 : vector<8x128xf32>
    %c3_75 = arith.constant 3 : index
    %c0_76 = arith.constant 0 : index
    %160 = memref.load %arg3[%c3_75, %c0_76] : memref<5x1xf32, #tpu.memory_space<smem>>
    %161 = vector.broadcast %160 : f32 to vector<8x128xf32>
    %162 = arith.mulf %161, %147 : vector<8x128xf32>
    %163 = arith.addf %159, %162 : vector<8x128xf32>
    %c4_77 = arith.constant 4 : index
    %c0_78 = arith.constant 0 : index
    %164 = memref.load %arg3[%c4_77, %c0_78] : memref<5x1xf32, #tpu.memory_space<smem>>
    %165 = vector.broadcast %164 : f32 to vector<8x128xf32>
    %166 = arith.mulf %165, %148 : vector<8x128xf32>
    %167 = arith.addf %163, %166 : vector<8x128xf32>
    %c0_79 = arith.constant 0 : index
    %c0_80 = arith.constant 0 : index
    %168 = vector.load %arg5[%c0_79, %c0_80] : memref<8x128xf32, #tpu.memory_space<vmem>>, vector<8x128xf32>
    tpu.vector_store %arg5[%c0_79, %c0_80], %167 {strides = array<i32>} : memref<8x128xf32, #tpu.memory_space<vmem>>, vector<8x128xf32>,
    return
  }
  func.func @transform_0(%arg0: i32) -> (i32, i32) {
    %c0_i32 = arith.constant 0 : i32
    %c0_i32_0 = arith.constant 0 : i32
    %c0_i32_1 = arith.constant 0 : i32
    return %c0_i32, %c0_i32_0 : i32, i32
  }
  func.func @transform_1(%arg0: i32) -> (i32, i32) {
    %c0_i32 = arith.constant 0 : i32
    %c0_i32_0 = arith.constant 0 : i32
    %c0_i32_1 = arith.constant 0 : i32
    return %c0_i32, %c0_i32_0 : i32, i32
  }
  func.func @transform_2(%arg0: i32) -> (i32, i32) {
    %c0_i32 = arith.constant 0 : i32
    %c0_i32_0 = arith.constant 0 : i32
    %c0_i32_1 = arith.constant 0 : i32
    return %c0_i32, %c0_i32_0 : i32, i32
  }
  func.func @transform_3(%arg0: i32) -> (i32, i32) {
    %c0_i32 = arith.constant 0 : i32
    %c0_i32_0 = arith.constant 0 : i32
    return %arg0, %c0_i32 : i32, i32
  }
  func.func @transform_4(%arg0: i32) -> (i32, i32) {
    %c0_i32 = arith.constant 0 : i32
    %c0_i32_0 = arith.constant 0 : i32
    return %arg0, %c0_i32 : i32, i32
  }
}

</mosaic_0001>

<llo_original>
// kernel: tpu_custom_call.1
$region0: #{tpu_custom_call.1}
  #allocation0 [shape = 'u32[]', space=smem, size = 0x4, offset = 0x4, fixed_abs, tag = 'smem constant byte address 0x4 - core index']
  #allocation1 [shape = 'u32[72,128]{1,0:T(1,128)}', space=vmem, size = 0x9000, scoped, tag = 'internal scratch']
  %s0 = inlined_call_operand.vmem [shape: f32[1,6], index: 0, kind: input, shape index: {}]
  %s1 = inlined_call_operand.vmem [shape: f32[5,6], index: 1, kind: input, shape index: {}]
  %s2 = inlined_call_operand.vmem [shape: f32[5,1], index: 2, kind: input, shape index: {}]
  %s3 = inlined_call_operand.hbm [shape: f32[40,128], index: 3, kind: input, shape index: {}]
  %s4 = inlined_call_operand.hbm [shape: f32[40,128], index: 4, kind: output, shape index: {}]
  %s5 = sld [smem:[#allocation0]]
  $region65: #{tpu_custom_call.1} parent=0
    _
  %s7 = ssub.s32 1, %s5
  %s8 = scalar_select 0, %s7, %s5
  $region1: #{tpu_custom_call.1} parent=0
    #allocation2 [shape = 'u8[512]{0}', space=smem, size = 0x200, scoped, tag = 'input window, operand 0, single buffered']
    #allocation3 [shape = 's32[2]{0}', space=sflag, size = 0x8, scoped, tag = 'scoped memory for tpu_custom_call.1']
    #allocation4 [shape = 's32[2]{0}', space=sflag, size = 0x8, scoped, tag = 'scoped memory for tpu_custom_call.1']
    #allocation5 [shape = 's32[2]{0}', space=sflag, size = 0x8, scoped, tag = 'scoped memory for tpu_custom_call.1']
    #allocation6 [shape = 'u8[4096]{0}', space=smem, size = 0x1000, scoped, tag = 'input window, operand 1, single buffered']
    #allocation7 [shape = 's32[1]{0}', space=sflag, size = 0x4, scoped, tag = 'scoped memory for tpu_custom_call.1']
    #allocation8 [shape = 'u8[4096]{0}', space=smem, size = 0x1000, scoped, tag = 'input window, operand 2, single buffered']
    #allocation9 [shape = 'u8[8192]{0}', space=vmem, size = 0x2000, scoped, tag = 'input window, operand 3']
    #allocation10 [shape = 'u8[8192]{0}', space=vmem, size = 0x2000, scoped, tag = 'output window, operand 0']
    %9 = vsyncpa [#allocation5], 0
    %10 = vsyncpa [#allocation7], 0
    %11 = vsyncpa [#allocation3], 0
    %s12 = scalar_lea.sflag [#allocation3], 1
    %13 = vsyncpa %s12, 0
    %14 = vsyncpa [#allocation4], 0
    %s15 = scalar_lea.sflag [#allocation4], 1
    %16 = vsyncpa %s15, 0
    loop: start=0, step=1, limit=7
    $region2: #{tpu_custom_call.1} parent=1 // loop_pre_header
      _
    $region3: #{tpu_custom_call.1} parent=1 // loop_header
      %s18 = sphi 0, %s22
      %p19 = scmp.ge.s32.totalorder %s18, 7
      %s26 = sphi 0, %s26
      %s28 = sphi 0, %s26
      %s29 = sphi 0, %s28
      %s43 = sphi 0, %s29
      %s47 = sphi 0, %s47
      %s49 = sphi 0, %s47
      %s50 = sphi 0, %s49
      %s64 = sphi 0, %s50
      %s68 = sphi 0, %s68
      %s70 = sphi 0, %s68
      %s71 = sphi 0, %s70
      %s85 = sphi 0, %s71
      %s91 = sphi 0, %s93
      %s94 = sphi 0, %s91
      %s95 = sphi 0, %s94
      %s111 = sphi 0, %s95
      %s117 = sphi 0, %s119
      %s120 = sphi 0, %s117
      %s121 = sphi 0, %s120
      %s137 = sphi 0, %s121
    $region4: #{tpu_custom_call.1} parent=1 // loop_header_branch
      %21 = sbr.rel (%p19) target = $region8
    $region5: #{tpu_custom_call.1} parent=1 // loop_body
      %s23 = ssub.s32 %s18, 1
      %s24 = ssub.s32 %s18, 2
      %s25 = sadd.s32 %s18, 1
      %s27 = sadd.s32 %s26, 1
      %p30 = scmp.eq.s32.totalorder %s18, 4
      %p31 = scmp.ne.s32.totalorder %s26, %s28
      %p32 = scmp.eq.s32.totalorder %s18, 0
      %p33 = por %p31, %p32
      %p34 = scmp.ne.s32.totalorder %s26, %s28
      %p35 = scmp.eq.s32.totalorder %s23, 4
      %p36 = por %p34, %p35
      %p37 = scmp.ne.s32.totalorder %s28, %s29
      %p38 = scmp.eq.s32.totalorder %s23, 0
      %p39 = por %p37, %p38
      %p40 = scmp.ne.s32.totalorder %s28, %s29
      %p41 = scmp.eq.s32.totalorder %s24, 4
      %p42 = por %p40, %p41
      %p44 = scmp.ne.s32.totalorder %s29, %s43
      %p45 = scmp.eq.s32.totalorder %s24, 0
      %p46 = por %p44, %p45
      %s48 = sadd.s32 %s47, 1
      %p51 = scmp.eq.s32.totalorder %s18, 4
      %p52 = scmp.ne.s32.totalorder %s47, %s49
      %p53 = scmp.eq.s32.totalorder %s18, 0
      %p54 = por %p52, %p53
      %p55 = scmp.ne.s32.totalorder %s47, %s49
      %p56 = scmp.eq.s32.totalorder %s23, 4
      %p57 = por %p55, %p56
      %p58 = scmp.ne.s32.totalorder %s49, %s50
      %p59 = scmp.eq.s32.totalorder %s23, 0
      %p60 = por %p58, %p59
      %p61 = scmp.ne.s32.totalorder %s49, %s50
      %p62 = scmp.eq.s32.totalorder %s24, 4
      %p63 = por %p61, %p62
      %p65 = scmp.ne.s32.totalorder %s50, %s64
      %p66 = scmp.eq.s32.totalorder %s24, 0
      %p67 = por %p65, %p66
      %s69 = sadd.s32 %s68, 1
      %p72 = scmp.eq.s32.totalorder %s18, 4
      %p73 = scmp.ne.s32.totalorder %s68, %s70
      %p74 = scmp.eq.s32.totalorder %s18, 0
      %p75 = por %p73, %p74
      %p76 = scmp.ne.s32.totalorder %s68, %s70
      %p77 = scmp.eq.s32.totalorder %s23, 4
      %p78 = por %p76, %p77
      %p79 = scmp.ne.s32.totalorder %s70, %s71
      %p80 = scmp.eq.s32.totalorder %s23, 0
      %p81 = por %p79, %p80
      %p82 = scmp.ne.s32.totalorder %s70, %s71
      %p83 = scmp.eq.s32.totalorder %s24, 4
      %p84 = por %p82, %p83
      %p86 = scmp.ne.s32.totalorder %s71, %s85
      %p87 = scmp.eq.s32.totalorder %s24, 0
      %p88 = por %p86, %p87
      %s89 = ssub.s32 %s18, %s25
      %p90 = scmp.eq.s32.totalorder %s89, 0
      %s92 = sadd.s32 %s91, 1
      %s93 = scalar_select %p90, %s91, %s92
      %p96 = pneg %p90
      %p97 = scmp.eq.s32.totalorder %s18, 4
      %p98 = por %p96, %p97
      %p99 = scmp.ne.s32.totalorder %s91, %s94
      %p100 = scmp.eq.s32.totalorder %s18, 0
      %p101 = por %p99, %p100
      %p102 = scmp.ne.s32.totalorder %s91, %s94
      %p103 = scmp.eq.s32.totalorder %s23, 4
      %p104 = por %p102, %p103
      %p105 = scmp.ne.s32.totalorder %s94, %s95
      %p106 = scmp.eq.s32.totalorder %s23, 0
      %p107 = por %p105, %p106
      %p108 = scmp.ne.s32.totalorder %s94, %s95
      %p109 = scmp.eq.s32.totalorder %s24, 4
      %p110 = por %p108, %p109
      %p112 = scmp.ne.s32.totalorder %s95, %s111
      %p113 = scmp.eq.s32.totalorder %s24, 0
      %p114 = por %p112, %p113
      %s115 = ssub.s32 %s18, %s25
      %p116 = scmp.eq.s32.totalorder %s115, 0
      %s118 = sadd.s32 %s117, 1
      %s119 = scalar_select %p116, %s117, %s118
      %p122 = pneg %p116
      %p123 = scmp.eq.s32.totalorder %s18, 4
      %p124 = por %p122, %p123
      %p125 = scmp.ne.s32.totalorder %s117, %s120
      %p126 = scmp.eq.s32.totalorder %s18, 0
      %p127 = por %p125, %p126
      %p128 = scmp.ne.s32.totalorder %s117, %s120
      %p129 = scmp.eq.s32.totalorder %s23, 4
      %p130 = por %p128, %p129
      %p131 = scmp.ne.s32.totalorder %s120, %s121
      %p132 = scmp.eq.s32.totalorder %s23, 0
      %p133 = por %p131, %p132
      %p134 = scmp.ne.s32.totalorder %s120, %s121
      %p135 = scmp.eq.s32.totalorder %s24, 4
      %p136 = por %p134, %p135
      %p138 = scmp.ne.s32.totalorder %s121, %s137
      %p139 = scmp.eq.s32.totalorder %s24, 0
      %p140 = por %p138, %p139
      %p141 = scmp.le.s32.totalorder 1, %s18
      %p142 = scmp.lt.s32.totalorder %s18, 6
      %p143 = pnand %p141, %p142
      %p144 = pneg %p143
      // Predicated region
      $region9: #{tpu_custom_call.1} parent=5 // pred_check
        _
      $region10: #{tpu_custom_call.1} parent=5 // pred_check_branch
        %146 = sbr.rel (%p143) target = $region12
      $region11: #{tpu_custom_call.1} parent=5 // pred_region
        %s147 = ssub.s32 %s18, 1
        // Predicated region
        $region13: #{tpu_custom_call.1} parent=11 // pred_check
          %p148 = pneg %p39
        $region14: #{tpu_custom_call.1} parent=11 // pred_check_branch
          %150 = sbr.rel (%p148) target = $region16
        $region15: #{tpu_custom_call.1} parent=11 // pred_region
          %152 = vsyncadd [#allocation5], 0
          %s154 = sshll.u32 %s0, 4
          %s155 = int_to_ptr.vmem [resolvable:$true] %s154
          %157 = dma.vmem_to_smem %s155, 16, [#allocation2], [#allocation5]
        $region16: #{tpu_custom_call.1} parent=11 // pred_fallthru
          _
        // Predicated region
        $region17: #{tpu_custom_call.1} parent=11 // pred_check
          %p158 = pneg %p60
        $region18: #{tpu_custom_call.1} parent=11 // pred_check_branch
          %160 = sbr.rel (%p158) target = $region20
        $region19: #{tpu_custom_call.1} parent=11 // pred_region
          %162 = vsyncadd [#allocation7], 0
          %s164 = sshll.u32 %s1, 4
          %s165 = int_to_ptr.vmem [resolvable:$true] %s164
          %167 = dma.vmem_to_smem %s165, 128, [#allocation6], [#allocation7]
        $region20: #{tpu_custom_call.1} parent=11 // pred_fallthru
          _
        // Predicated region
        $region21: #{tpu_custom_call.1} parent=11 // pred_check
          %p168 = pneg %p81
        $region22: #{tpu_custom_call.1} parent=11 // pred_check_branch
          %170 = sbr.rel (%p168) target = $region24
        $region23: #{tpu_custom_call.1} parent=11 // pred_region
          %172 = vsyncadd [#allocation7], 0
          %s174 = sshll.u32 %s2, 4
          %s175 = int_to_ptr.vmem [resolvable:$true] %s174
          %177 = dma.vmem_to_smem %s175, 128, [#allocation8], [#allocation7]
        $region24: #{tpu_custom_call.1} parent=11 // pred_fallthru
          _
      $region12: #{tpu_custom_call.1} parent=5 // pred_fallthru
        _
      %p178 = scmp.lt.s32.totalorder %s18, 5
      // Predicated region
      $region25: #{tpu_custom_call.1} parent=5 // pred_check
        %p179 = pneg %p178
      $region26: #{tpu_custom_call.1} parent=5 // pred_check_branch
        %181 = sbr.rel (%p179) target = $region28
      $region27: #{tpu_custom_call.1} parent=5 // pred_region
        // Predicated region
        $region29: #{tpu_custom_call.1} parent=27 // pred_check
          %p182 = pneg %p101
        $region30: #{tpu_custom_call.1} parent=27 // pred_check_branch
          %184 = sbr.rel (%p182) target = $region32
        $region31: #{tpu_custom_call.1} parent=27 // pred_region
          %s185 = sand.u32 %s91, 1
          %s186 = scalar_lea.sflag [#allocation3], %s185
          %s187 = sand.u32 %s91, 1
          %s188 = smul.addr %s187, 8
          %s189 = scalar_lea.vmem [#allocation9], %s188
          %191 = vsyncadd %s186, 0
          %s192 = smul.addr %s18, 8
          %s193 = scalar_lea.hbm %s3, %s192
          %s195 = sshll.u32 %s193, 4
          %s196 = int_to_ptr.hbm [resolvable:$true] %s195
          %s197 = sshll.u32 %s189, 4
          %s198 = int_to_ptr.vmem [resolvable:$true] %s197
          %200 = dma.hbm_to_vmem [thread:$0]  %s196, 128, %s198, %s186
        $region32: #{tpu_custom_call.1} parent=27 // pred_fallthru
          _
      $region28: #{tpu_custom_call.1} parent=5 // pred_fallthru
        _
      %p201 = scmp.le.s32.totalorder 1, %s18
      %p202 = scmp.lt.s32.totalorder %s18, 6
      %p203 = pnand %p201, %p202
      %p204 = pneg %p203
      // Predicated region
      $region33: #{tpu_custom_call.1} parent=5 // pred_check
        _
      $region34: #{tpu_custom_call.1} parent=5 // pred_check_branch
        %206 = sbr.rel (%p203) target = $region36
      $region35: #{tpu_custom_call.1} parent=5 // pred_region
        %s207 = ssub.s32 %s18, 1
        // Predicated region
        $region37: #{tpu_custom_call.1} parent=35 // pred_check
          %p208 = pneg %p39
        $region38: #{tpu_custom_call.1} parent=35 // pred_check_branch
          %210 = sbr.rel (%p208) target = $region40
        $region39: #{tpu_custom_call.1} parent=35 // pred_region
          %212 = dma.done [#allocation5], 16
        $region40: #{tpu_custom_call.1} parent=35 // pred_fallthru
          _
        // Predicated region
        $region41: #{tpu_custom_call.1} parent=35 // pred_check
          %p213 = pneg %p60
        $region42: #{tpu_custom_call.1} parent=35 // pred_check_branch
          %215 = sbr.rel (%p213) target = $region44
        $region43: #{tpu_custom_call.1} parent=35 // pred_region
          %217 = dma.done [#allocation7], 128
        $region44: #{tpu_custom_call.1} parent=35 // pred_fallthru
          _
        // Predicated region
        $region45: #{tpu_custom_call.1} parent=35 // pred_check
          %p218 = pneg %p81
        $region46: #{tpu_custom_call.1} parent=35 // pred_check_branch
          %220 = sbr.rel (%p218) target = $region48
        $region47: #{tpu_custom_call.1} parent=35 // pred_region
          %222 = dma.done [#allocation7], 128
        $region48: #{tpu_custom_call.1} parent=35 // pred_fallthru
          _
        %s223 = sand.u32 %s94, 1
        %s224 = scalar_lea.sflag [#allocation3], %s223
        %s225 = sand.u32 %s94, 1
        %s226 = smul.addr %s225, 8
        %s227 = scalar_lea.vmem [#allocation9], %s226
        // Predicated region
        $region49: #{tpu_custom_call.1} parent=35 // pred_check
          %p228 = pneg %p107
        $region50: #{tpu_custom_call.1} parent=35 // pred_check_branch
          %230 = sbr.rel (%p228) target = $region52
        $region51: #{tpu_custom_call.1} parent=35 // pred_region
          %232 = dma.done %s224, 128
        $region52: #{tpu_custom_call.1} parent=35 // pred_fallthru
          _
        %233 = sfence
        %p234 = pneg %p39
        %p235 = pneg %p36
        %p236 = pneg %p60
        %p237 = pneg %p57
        %p238 = pneg %p81
        %p239 = pneg %p78
        %s240 = sand.u32 %s94, 1
        %s241 = scalar_lea.sflag [#allocation3], %s240
        %s242 = sand.u32 %s94, 1
        %s243 = smul.addr %s242, 8
        %s244 = scalar_lea.vmem [#allocation9], %s243
        %p245 = pneg %p107
        %p246 = pneg %p104
        %p247 = pneg %p133
        %p248 = pneg %p130
        %s249 = sand.u32 %s120, 1
        %s250 = scalar_lea.sflag [#allocation4], %s249
        %s251 = sand.u32 %s120, 1
        %s252 = smul.addr %s251, 8
        %s253 = scalar_lea.vmem [#allocation10], %s252
        %v254 = vld [vmem:[%s227] sm:$0xff]
        %s255 = sld [smem:[#allocation2]]
        %v256 = vstv %s255
        %v257 = vmul.f32 %v256, %v254
        %s258 = sld [smem:[#allocation2 + $0x1]]
        %v259 = vstv %s258
        %v260 = vmul.f32 %v259, %v254
        %s261 = sld [smem:[#allocation2 + $0x2]]
        %v262 = vstv %s261
        %v263 = vmul.f32 %v262, %v254
        %s264 = sld [smem:[#allocation2 + $0x3]]
        %v265 = vstv %s264
        %v266 = vmul.f32 %v265, %v254
        %s267 = sld [smem:[#allocation2 + $0x4]]
        %v268 = vstv %s267
        %v269 = vmul.f32 %v268, %v254
        %s270 = sld [smem:[#allocation2 + $0x5]]
        %v271 = vstv %s270
        %v272 = vmul.f32 %v271, %v254
        %v273 = vand.u32 2147483647, %v260
        %vm274 = vcmp.le.f32.partialorder %v273, 0.7853982
        %vm275 = vcmp.lt.s32.totalorder %v260, 0
        %v276 = vand.u32 %v260, 2139095040
        %v277 = vshrl.u32 %v276, 23
        %v278 = vsub.s32 %v277, 127
        %v279 = vand.u32 2147483647, %v260
        %v280 = vand.u32 %v279, 8388607
        %v281 = vor.u32 %v280, 8388608
        %v282 = vsub.s32 0, %v281
        %v283 = vadd.s32 %v278, 1
        %vm284 = vcmp.gt.s32.totalorder %v283, 0
        %v285 = vsel %vm284, %v283, 0
        %v286 = vshrl.u32 %v285, 5
        %v287 = vand.u32 %v285, 31
        %v288 = vsub.s32 32, %v287
        %v289 = vshrl.u32 683565275, %v288
        %v290 = vshll.u32 683565275, %v287
        %v291 = vshrl.u32 2475754826, %v288
        %v292 = vor.u32 %v290, %v291
        %v293 = vshll.u32 2475754826, %v287
        %v294 = vshrl.u32 2131351028, %v288
        %v295 = vor.u32 %v293, %v294
        %v296 = vshll.u32 2131351028, %v287
        %v297 = vshrl.u32 2102212464, %v288
        %v298 = vor.u32 %v296, %v297
        %v299 = vshll.u32 2102212464, %v287
        %v300 = vshrl.u32 920167782, %v288
        %v301 = vor.u32 %v299, %v300
        %v302 = vshll.u32 920167782, %v287
        %v303 = vshrl.u32 1326507024, %v288
        %v304 = vor.u32 %v302, %v303
        %vm305 = vcmp.lt.s32.totalorder %v286, 1
        %vm306 = vcmp.lt.s32.totalorder %v286, 2
        %vm307 = vcmp.lt.s32.totalorder %v286, 3
        %vm308 = vcmp.lt.s32.totalorder %v286, 4
        %v309 = vsel %vm305, %v289, %v292
        %v310 = vsel %vm308, %v298, 2102212464
        %v311 = vsel %vm307, %v295, %v310
        %v312 = vsel %vm306, %v309, %v311
        %v313 = vsel %vm305, %v292, %v295
        %v314 = vsel %vm308, %v301, 920167782
        %v315 = vsel %vm307, %v298, %v314
        %v316 = vsel %vm306, %v313, %v315
        %v317 = vsel %vm305, %v295, %v298
        %v318 = vsel %vm308, %v304, 1326507024
        %v319 = vsel %vm307, %v301, %v318
        %v320 = vsel %vm306, %v317, %v319
        %v321 = vshll.u32 %v281, 8
        %v322 = vand.u32 %v321, 65535
        %v323 = vshrl.u32 %v321, 16
        %v324 = vand.u32 %v320, 65535
        %v325 = vshrl.u32 %v320, 16
        %v326 = vmul.u32 %v322, %v324
        %v327 = vmul.u32 %v322, %v325
        %v328 = vmul.u32 %v323, %v324
        %v329 = vmul.u32 %v323, %v325
        %v330 = vshll.u32 %v327, 16
        %v331 = vshrl.u32 %v327, 16
        %v332 = vshll.u32 %v328, 16
        %v333 = vshrl.u32 %v328, 16
        %vm334 = vc.u32 %v326, %v330
        %v335 = vsel %vm334, 1, 0
        %v336 = vadd.s32 %v326, %v330
        %v337 = vadd.s32 %v329, %v335
        %vm338 = vc.u32 %v336, %v332
        %v339 = vsel %vm338, 1, 0
        %v340 = vadd.s32 %v336, %v332
        %v341 = vadd.s32 %v337, %v339
        %v342 = vadd.s32 %v341, %v331
        %v343 = vadd.s32 %v342, %v333
        %v344 = vand.u32 %v321, 65535
        %v345 = vshrl.u32 %v321, 16
        %v346 = vand.u32 %v316, 65535
        %v347 = vshrl.u32 %v316, 16
        %v348 = vmul.u32 %v344, %v346
        %v349 = vmul.u32 %v344, %v347
        %v350 = vmul.u32 %v345, %v346
        %v351 = vmul.u32 %v345, %v347
        %v352 = vshll.u32 %v349, 16
        %v353 = vshrl.u32 %v349, 16
        %v354 = vshll.u32 %v350, 16
        %v355 = vshrl.u32 %v350, 16
        %vm356 = vc.u32 %v348, %v352
        %v357 = vsel %vm356, 1, 0
        %v358 = vadd.s32 %v348, %v352
        %v359 = vadd.s32 %v351, %v357
        %vm360 = vc.u32 %v358, %v354
        %v361 = vsel %vm360, 1, 0
        %v362 = vadd.s32 %v358, %v354
        %v363 = vadd.s32 %v359, %v361
        %v364 = vadd.s32 %v363, %v353
        %v365 = vadd.s32 %v364, %v355
        %v366 = vmul.u32 %v321, %v312
        %v367 = vadd.s32 %v343, %v362
        %vm368 = vc.u32 %v343, %v362
        %v369 = vadd.s32 %v365, 1
        %v370 = vsel %vm368, %v369, %v365
        %v371 = vadd.s32 %v366, %v370
        %v372 = vadd.s32 %v371, 536870912
        %v373 = vshrl.u32 %v372, 30
        %v374 = vshll.u32 %v373, 30
        %v375 = vsub.s32 %v371, %v374
        %vm376 = vcmp.lt.s32.totalorder %v375, 0
        %v377 = vsub.s32 0, %v375
        %v378 = vsel %vm376, %v377, %v375
        %v379 = vclz %v378
        %v380 = vsub.s32 %v379, 2
        %vm381 = vcmp.gt.s32.totalorder 0, %v380
        %v382 = vsel %vm381, 0, %v380
        %v383 = vsub.s32 32, %v382
        %v384 = vshll.u32 %v375, %v382
        %v385 = vshrl.u32 %v367, %v383
        %v386 = vor.u32 %v384, %v385
        %v387 = vsub.s32 4294967266, %v382
        %v388 = vadd.s32 %v387, 127
        %v389 = vshll.u32 %v388, 23
        %v390 = vor.u32 4788187, %v389
        %v391 = vand.u32 2147483647, %v390
        %v393 = vcvt.s32.f32 %v386
        %v394 = vmul.f32 %v393, %v391
        %v395 = vxor.u32 %v394, 2147483648
        %v396 = vsel %vm275, %v395, %v394
        %v397 = vsub.s32 4, %v373
        %v398 = vsel %vm275, %v397, %v373
        %v399 = vsel %vm274, %v260, %v396
        %v400 = vsel %vm274, 0, %v398
        %v401 = vmul.f32 %v399, %v399
        %v402 = vmul.f32 %v401, -0.001358992
        %v403 = vadd.f32 %v402, 0.041655596
        %v404 = vmul.f32 %v401, %v403
        %v405 = vadd.f32 %v404, -0.4999988
        %v406 = vmul.f32 %v401, %v405
        %v407 = vadd.f32 1.0, %v406
        %v408 = vmul.f32 %v399, %v399
        %v409 = vmul.f32 %v408, -0.00019511016
        %v410 = vadd.f32 %v409, 0.008332121
        %v411 = vmul.f32 %v408, %v410
        %v412 = vadd.f32 %v411, -0.16666654
        %v413 = vmul.f32 %v408, %v412
        %v414 = vadd.f32 %v413, 1.0
        %v415 = vmul.f32 %v414, %v399
        %vm416 = vweird.f32 %v260
        %v417 = vadd.s32 %v400, 3
        %v418 = vand.u32 %v417, 3
        %vm419 = vcmp.lt.s32.totalorder %v418, 2
        %vm420 = vcmp.eq.s32.totalorder %v418, 0
        %v421 = vxor.u32 %v415, 2147483648
        %v422 = vsel %vm420, %v407, %v421
        %vm423 = vcmp.eq.s32.totalorder %v418, 2
        %v424 = vxor.u32 %v407, 2147483648
        %v425 = vsel %vm423, %v424, %v415
        %v426 = vsel %vm419, %v422, %v425
        %v427 = vsel %vm416, nan, %v426
        %v428 = vand.u32 2147483647, %v263
        %vm429 = vcmp.le.f32.partialorder %v428, 0.7853982
        %vm430 = vcmp.lt.s32.totalorder %v263, 0
        %v431 = vand.u32 %v263, 2139095040
        %v432 = vshrl.u32 %v431, 23
        %v433 = vsub.s32 %v432, 127
        %v434 = vand.u32 2147483647, %v263
        %v435 = vand.u32 %v434, 8388607
        %v436 = vor.u32 %v435, 8388608
        %v437 = vsub.s32 0, %v436
        %v438 = vadd.s32 %v433, 1
        %vm439 = vcmp.gt.s32.totalorder %v438, 0
        %v440 = vsel %vm439, %v438, 0
        %v441 = vshrl.u32 %v440, 5
        %v442 = vand.u32 %v440, 31
        %v443 = vsub.s32 32, %v442
        %v444 = vshrl.u32 683565275, %v443
        %v445 = vshll.u32 683565275, %v442
        %v446 = vshrl.u32 2475754826, %v443
        %v447 = vor.u32 %v445, %v446
        %v448 = vshll.u32 2475754826, %v442
        %v449 = vshrl.u32 2131351028, %v443
        %v450 = vor.u32 %v448, %v449
        %v451 = vshll.u32 2131351028, %v442
        %v452 = vshrl.u32 2102212464, %v443
        %v453 = vor.u32 %v451, %v452
        %v454 = vshll.u32 2102212464, %v442
        %v455 = vshrl.u32 920167782, %v443
        %v456 = vor.u32 %v454, %v455
        %v457 = vshll.u32 920167782, %v442
        %v458 = vshrl.u32 1326507024, %v443
        %v459 = vor.u32 %v457, %v458
        %vm460 = vcmp.lt.s32.totalorder %v441, 1
        %vm461 = vcmp.lt.s32.totalorder %v441, 2
        %vm462 = vcmp.lt.s32.totalorder %v441, 3
        %vm463 = vcmp.lt.s32.totalorder %v441, 4
        %v464 = vsel %vm460, %v444, %v447
        %v465 = vsel %vm463, %v453, 2102212464
        %v466 = vsel %vm462, %v450, %v465
        %v467 = vsel %vm461, %v464, %v466
        %v468 = vsel %vm460, %v447, %v450
        %v469 = vsel %vm463, %v456, 920167782
        %v470 = vsel %vm462, %v453, %v469
        %v471 = vsel %vm461, %v468, %v470
        %v472 = vsel %vm460, %v450, %v453
        %v473 = vsel %vm463, %v459, 1326507024
        %v474 = vsel %vm462, %v456, %v473
        %v475 = vsel %vm461, %v472, %v474
        %v476 = vshll.u32 %v436, 8
        %v477 = vand.u32 %v476, 65535
        %v478 = vshrl.u32 %v476, 16
        %v479 = vand.u32 %v475, 65535
        %v480 = vshrl.u32 %v475, 16
        %v481 = vmul.u32 %v477, %v479
        %v482 = vmul.u32 %v477, %v480
        %v483 = vmul.u32 %v478, %v479
        %v484 = vmul.u32 %v478, %v480
        %v485 = vshll.u32 %v482, 16
        %v486 = vshrl.u32 %v482, 16
        %v487 = vshll.u32 %v483, 16
        %v488 = vshrl.u32 %v483, 16
        %vm489 = vc.u32 %v481, %v485
        %v490 = vsel %vm489, 1, 0
        %v491 = vadd.s32 %v481, %v485
        %v492 = vadd.s32 %v484, %v490
        %vm493 = vc.u32 %v491, %v487
        %v494 = vsel %vm493, 1, 0
        %v495 = vadd.s32 %v491, %v487
        %v496 = vadd.s32 %v492, %v494
        %v497 = vadd.s32 %v496, %v486
        %v498 = vadd.s32 %v497, %v488
        %v499 = vand.u32 %v476, 65535
        %v500 = vshrl.u32 %v476, 16
        %v501 = vand.u32 %v471, 65535
        %v502 = vshrl.u32 %v471, 16
        %v503 = vmul.u32 %v499, %v501
        %v504 = vmul.u32 %v499, %v502
        %v505 = vmul.u32 %v500, %v501
        %v506 = vmul.u32 %v500, %v502
        %v507 = vshll.u32 %v504, 16
        %v508 = vshrl.u32 %v504, 16
        %v509 = vshll.u32 %v505, 16
        %v510 = vshrl.u32 %v505, 16
        %vm511 = vc.u32 %v503, %v507
        %v512 = vsel %vm511, 1, 0
        %v513 = vadd.s32 %v503, %v507
        %v514 = vadd.s32 %v506, %v512
        %vm515 = vc.u32 %v513, %v509
        %v516 = vsel %vm515, 1, 0
        %v517 = vadd.s32 %v513, %v509
        %v518 = vadd.s32 %v514, %v516
        %v519 = vadd.s32 %v518, %v508
        %v520 = vadd.s32 %v519, %v510
        %v521 = vmul.u32 %v476, %v467
        %v522 = vadd.s32 %v498, %v517
        %vm523 = vc.u32 %v498, %v517
        %v524 = vadd.s32 %v520, 1
        %v525 = vsel %vm523, %v524, %v520
        %v526 = vadd.s32 %v521, %v525
        %v527 = vadd.s32 %v526, 536870912
        %v528 = vshrl.u32 %v527, 30
        %v529 = vshll.u32 %v528, 30
        %v530 = vsub.s32 %v526, %v529
        %vm531 = vcmp.lt.s32.totalorder %v530, 0
        %v532 = vsub.s32 0, %v530
        %v533 = vsel %vm531, %v532, %v530
        %v534 = vclz %v533
        %v535 = vsub.s32 %v534, 2
        %vm536 = vcmp.gt.s32.totalorder 0, %v535
        %v537 = vsel %vm536, 0, %v535
        %v538 = vsub.s32 32, %v537
        %v539 = vshll.u32 %v530, %v537
        %v540 = vshrl.u32 %v522, %v538
        %v541 = vor.u32 %v539, %v540
        %v542 = vsub.s32 4294967266, %v537
        %v543 = vadd.s32 %v542, 127
        %v544 = vshll.u32 %v543, 23
        %v545 = vor.u32 4788187, %v544
        %v546 = vand.u32 2147483647, %v545
        %v548 = vcvt.s32.f32 %v541
        %v549 = vmul.f32 %v548, %v546
        %v550 = vxor.u32 %v549, 2147483648
        %v551 = vsel %vm430, %v550, %v549
        %v552 = vsub.s32 4, %v528
        %v553 = vsel %vm430, %v552, %v528
        %v554 = vsel %vm429, %v263, %v551
        %v555 = vsel %vm429, 0, %v553
        %v556 = vmul.f32 %v554, %v554
        %v557 = vmul.f32 %v556, -0.001358992
        %v558 = vadd.f32 %v557, 0.041655596
        %v559 = vmul.f32 %v556, %v558
        %v560 = vadd.f32 %v559, -0.4999988
        %v561 = vmul.f32 %v556, %v560
        %v562 = vadd.f32 1.0, %v561
        %v563 = vmul.f32 %v554, %v554
        %v564 = vmul.f32 %v563, -0.00019511016
        %v565 = vadd.f32 %v564, 0.008332121
        %v566 = vmul.f32 %v563, %v565
        %v567 = vadd.f32 %v566, -0.16666654
        %v568 = vmul.f32 %v563, %v567
        %v569 = vadd.f32 %v568, 1.0
        %v570 = vmul.f32 %v569, %v554
        %vm571 = vweird.f32 %v263
        %v572 = vand.u32 %v555, 3
        %vm573 = vcmp.lt.s32.totalorder %v572, 2
        %vm574 = vcmp.eq.s32.totalorder %v572, 0
        %v575 = vxor.u32 %v570, 2147483648
        %v576 = vsel %vm574, %v562, %v575
        %vm577 = vcmp.eq.s32.totalorder %v572, 2
        %v578 = vxor.u32 %v562, 2147483648
        %v579 = vsel %vm577, %v578, %v570
        %v580 = vsel %vm573, %v576, %v579
        %v581 = vsel %vm571, nan, %v580
        %v582 = vxor.u32 %v266, 2147483648
        %v583 = vmul.f32 %v582, 1.442695
        %v584 = vpow.pop %v583
        %v585 = vadd.f32 %v584, 1.0
        %v586 = vrcp.pop %v585
        %v587 = vmul.f32 %v585, %v586
        %v588 = vsub.f32 1.0, %v587
        %v589 = vmul.f32 %v586, %v588
        %v590 = vadd.f32 %v586, %v589
        %vm591 = vweird.f32 %v585
        %vm592 = vweird.f32 %v586
        %vm593 = vmor %vm591, %vm592
        %v594 = vsel %vm593, %v586, %v590
        %v595 = vand.u32 2147483647, %v585
        %vm596 = vcmp.eq.f32.partialorder %v595, 8.507059e+37
        %v597 = vand.u32 %v585, 2147483648
        %v598 = vor.u32 1.1754944e-38, %v597
        %v599 = vsel %vm596, %v598, %v594
        %v600 = vmul.f32 1.0, %v599
        %v601 = vmul.f32 %v269, %v272
        %s602 = sld [smem:[#allocation6]]
        %v603 = vstv %s602
        %v604 = vmul.f32 %v603, %v257
        %s605 = sld [smem:[#allocation6 + $0x80]]
        %v606 = vstv %s605
        %v607 = vmul.f32 %v606, %v427
        %v608 = vadd.f32 %v604, %v607
        %s609 = sld [smem:[#allocation6 + $0x100]]
        %v610 = vstv %s609
        %v611 = vmul.f32 %v610, %v581
        %v612 = vadd.f32 %v608, %v611
        %s613 = sld [smem:[#allocation6 + $0x180]]
        %v614 = vstv %s613
        %v615 = vmul.f32 %v614, %v600
        %v616 = vadd.f32 %v612, %v615
        %s617 = sld [smem:[#allocation6 + $0x200]]
        %v618 = vstv %s617
        %v619 = vmul.f32 %v618, %v601
        %v620 = vadd.f32 %v616, %v619
        %s621 = sld [smem:[#allocation6 + $0x1]]
        %v622 = vstv %s621
        %v623 = vmul.f32 %v622, %v257
        %s624 = sld [smem:[#allocation6 + $0x81]]
        %v625 = vstv %s624
        %v626 = vmul.f32 %v625, %v427
        %v627 = vadd.f32 %v623, %v626
        %s628 = sld [smem:[#allocation6 + $0x101]]
        %v629 = vstv %s628
        %v630 = vmul.f32 %v629, %v581
        %v631 = vadd.f32 %v627, %v630
        %s632 = sld [smem:[#allocation6 + $0x181]]
        %v633 = vstv %s632
        %v634 = vmul.f32 %v633, %v600
        %v635 = vadd.f32 %v631, %v634
        %s636 = sld [smem:[#allocation6 + $0x201]]
        %v637 = vstv %s636
        %v638 = vmul.f32 %v637, %v601
        %v639 = vadd.f32 %v635, %v638
        %s640 = sld [smem:[#allocation6 + $0x2]]
        %v641 = vstv %s640
        %v642 = vmul.f32 %v641, %v257
        %s643 = sld [smem:[#allocation6 + $0x82]]
        %v644 = vstv %s643
        %v645 = vmul.f32 %v644, %v427
        %v646 = vadd.f32 %v642, %v645
        %s647 = sld [smem:[#allocation6 + $0x102]]
        %v648 = vstv %s647
        %v649 = vmul.f32 %v648, %v581
        %v650 = vadd.f32 %v646, %v649
        %s651 = sld [smem:[#allocation6 + $0x182]]
        %v652 = vstv %s651
        %v653 = vmul.f32 %v652, %v600
        %v654 = vadd.f32 %v650, %v653
        %s655 = sld [smem:[#allocation6 + $0x202]]
        %v656 = vstv %s655
        %v657 = vmul.f32 %v656, %v601
        %v658 = vadd.f32 %v654, %v657
        %s659 = sld [smem:[#allocation6 + $0x3]]
        %v660 = vstv %s659
        %v661 = vmul.f32 %v660, %v257
        %s662 = sld [smem:[#allocation6 + $0x83]]
        %v663 = vstv %s662
        %v664 = vmul.f32 %v663, %v427
        %v665 = vadd.f32 %v661, %v664
        %s666 = sld [smem:[#allocation6 + $0x103]]
        %v667 = vstv %s666
        %v668 = vmul.f32 %v667, %v581
        %v669 = vadd.f32 %v665, %v668
        %s670 = sld [smem:[#allocation6 + $0x183]]
        %v671 = vstv %s670
        %v672 = vmul.f32 %v671, %v600
        %v673 = vadd.f32 %v669, %v672
        %s674 = sld [smem:[#allocation6 + $0x203]]
        %v675 = vstv %s674
        %v676 = vmul.f32 %v675, %v601
        %v677 = vadd.f32 %v673, %v676
        %s678 = sld [smem:[#allocation6 + $0x4]]
        %v679 = vstv %s678
        %v680 = vmul.f32 %v679, %v257
        %s681 = sld [smem:[#allocation6 + $0x84]]
        %v682 = vstv %s681
        %v683 = vmul.f32 %v682, %v427
        %v684 = vadd.f32 %v680, %v683
        %s685 = sld [smem:[#allocation6 + $0x104]]
        %v686 = vstv %s685
        %v687 = vmul.f32 %v686, %v581
        %v688 = vadd.f32 %v684, %v687
        %s689 = sld [smem:[#allocation6 + $0x184]]
        %v690 = vstv %s689
        %v691 = vmul.f32 %v690, %v600
        %v692 = vadd.f32 %v688, %v691
        %s693 = sld [smem:[#allocation6 + $0x204]]
        %v694 = vstv %s693
        %v695 = vmul.f32 %v694, %v601
        %v696 = vadd.f32 %v692, %v695
        %s697 = sld [smem:[#allocation6 + $0x5]]
        %v698 = vstv %s697
        %v699 = vmul.f32 %v698, %v257
        %s700 = sld [smem:[#allocation6 + $0x85]]
        %v701 = vstv %s700
        %v702 = vmul.f32 %v701, %v427
        %v703 = vadd.f32 %v699, %v702
        %s704 = sld [smem:[#allocation6 + $0x105]]
        %v705 = vstv %s704
        %v706 = vmul.f32 %v705, %v581
        %v707 = vadd.f32 %v703, %v706
        %s708 = sld [smem:[#allocation6 + $0x185]]
        %v709 = vstv %s708
        %v710 = vmul.f32 %v709, %v600
        %v711 = vadd.f32 %v707, %v710
        %s712 = sld [smem:[#allocation6 + $0x205]]
        %v713 = vstv %s712
        %v714 = vmul.f32 %v713, %v601
        %v715 = vadd.f32 %v711, %v714
        %v716 = vand.u32 2147483647, %v639
        %vm717 = vcmp.le.f32.partialorder %v716, 0.7853982
        %vm718 = vcmp.lt.s32.totalorder %v639, 0
        %v719 = vand.u32 %v639, 2139095040
        %v720 = vshrl.u32 %v719, 23
        %v721 = vsub.s32 %v720, 127
        %v722 = vand.u32 2147483647, %v639
        %v723 = vand.u32 %v722, 8388607
        %v724 = vor.u32 %v723, 8388608
        %v725 = vsub.s32 0, %v724
        %v726 = vadd.s32 %v721, 1
        %vm727 = vcmp.gt.s32.totalorder %v726, 0
        %v728 = vsel %vm727, %v726, 0
        %v729 = vshrl.u32 %v728, 5
        %v730 = vand.u32 %v728, 31
        %v731 = vsub.s32 32, %v730
        %v732 = vshrl.u32 683565275, %v731
        %v733 = vshll.u32 683565275, %v730
        %v734 = vshrl.u32 2475754826, %v731
        %v735 = vor.u32 %v733, %v734
        %v736 = vshll.u32 2475754826, %v730
        %v737 = vshrl.u32 2131351028, %v731
        %v738 = vor.u32 %v736, %v737
        %v739 = vshll.u32 2131351028, %v730
        %v740 = vshrl.u32 2102212464, %v731
        %v741 = vor.u32 %v739, %v740
        %v742 = vshll.u32 2102212464, %v730
        %v743 = vshrl.u32 920167782, %v731
        %v744 = vor.u32 %v742, %v743
        %v745 = vshll.u32 920167782, %v730
        %v746 = vshrl.u32 1326507024, %v731
        %v747 = vor.u32 %v745, %v746
        %vm748 = vcmp.lt.s32.totalorder %v729, 1
        %vm749 = vcmp.lt.s32.totalorder %v729, 2
        %vm750 = vcmp.lt.s32.totalorder %v729, 3
        %vm751 = vcmp.lt.s32.totalorder %v729, 4
        %v752 = vsel %vm748, %v732, %v735
        %v753 = vsel %vm751, %v741, 2102212464
        %v754 = vsel %vm750, %v738, %v753
        %v755 = vsel %vm749, %v752, %v754
        %v756 = vsel %vm748, %v735, %v738
        %v757 = vsel %vm751, %v744, 920167782
        %v758 = vsel %vm750, %v741, %v757
        %v759 = vsel %vm749, %v756, %v758
        %v760 = vsel %vm748, %v738, %v741
        %v761 = vsel %vm751, %v747, 1326507024
        %v762 = vsel %vm750, %v744, %v761
        %v763 = vsel %vm749, %v760, %v762
        %v764 = vshll.u32 %v724, 8
        %v765 = vand.u32 %v764, 65535
        %v766 = vshrl.u32 %v764, 16
        %v767 = vand.u32 %v763, 65535
        %v768 = vshrl.u32 %v763, 16
        %v769 = vmul.u32 %v765, %v767
        %v770 = vmul.u32 %v765, %v768
        %v771 = vmul.u32 %v766, %v767
        %v772 = vmul.u32 %v766, %v768
        %v773 = vshll.u32 %v770, 16
        %v774 = vshrl.u32 %v770, 16
        %v775 = vshll.u32 %v771, 16
        %v776 = vshrl.u32 %v771, 16
        %vm777 = vc.u32 %v769, %v773
        %v778 = vsel %vm777, 1, 0
        %v779 = vadd.s32 %v769, %v773
        %v780 = vadd.s32 %v772, %v778
        %vm781 = vc.u32 %v779, %v775
        %v782 = vsel %vm781, 1, 0
        %v783 = vadd.s32 %v779, %v775
        %v784 = vadd.s32 %v780, %v782
        %v785 = vadd.s32 %v784, %v774
        %v786 = vadd.s32 %v785, %v776
        %v787 = vand.u32 %v764, 65535
        %v788 = vshrl.u32 %v764, 16
        %v789 = vand.u32 %v759, 65535
        %v790 = vshrl.u32 %v759, 16
        %v791 = vmul.u32 %v787, %v789
        %v792 = vmul.u32 %v787, %v790
        %v793 = vmul.u32 %v788, %v789
        %v794 = vmul.u32 %v788, %v790
        %v795 = vshll.u32 %v792, 16
        %v796 = vshrl.u32 %v792, 16
        %v797 = vshll.u32 %v793, 16
        %v798 = vshrl.u32 %v793, 16
        %vm799 = vc.u32 %v791, %v795
        %v800 = vsel %vm799, 1, 0
        %v801 = vadd.s32 %v791, %v795
        %v802 = vadd.s32 %v794, %v800
        %vm803 = vc.u32 %v801, %v797
        %v804 = vsel %vm803, 1, 0
        %v805 = vadd.s32 %v801, %v797
        %v806 = vadd.s32 %v802, %v804
        %v807 = vadd.s32 %v806, %v796
        %v808 = vadd.s32 %v807, %v798
        %v809 = vmul.u32 %v764, %v755
        %v810 = vadd.s32 %v786, %v805
        %vm811 = vc.u32 %v786, %v805
        %v812 = vadd.s32 %v808, 1
        %v813 = vsel %vm811, %v812, %v808
        %v814 = vadd.s32 %v809, %v813
        %v815 = vadd.s32 %v814, 536870912
        %v816 = vshrl.u32 %v815, 30
        %v817 = vshll.u32 %v816, 30
        %v818 = vsub.s32 %v814, %v817
        %vm819 = vcmp.lt.s32.totalorder %v818, 0
        %v820 = vsub.s32 0, %v818
        %v821 = vsel %vm819, %v820, %v818
        %v822 = vclz %v821
        %v823 = vsub.s32 %v822, 2
        %vm824 = vcmp.gt.s32.totalorder 0, %v823
        %v825 = vsel %vm824, 0, %v823
        %v826 = vsub.s32 32, %v825
        %v827 = vshll.u32 %v818, %v825
        %v828 = vshrl.u32 %v810, %v826
        %v829 = vor.u32 %v827, %v828
        %v830 = vsub.s32 4294967266, %v825
        %v831 = vadd.s32 %v830, 127
        %v832 = vshll.u32 %v831, 23
        %v833 = vor.u32 4788187, %v832
        %v834 = vand.u32 2147483647, %v833
        %v836 = vcvt.s32.f32 %v829
        %v837 = vmul.f32 %v836, %v834
        %v838 = vxor.u32 %v837, 2147483648
        %v839 = vsel %vm718, %v838, %v837
        %v840 = vsub.s32 4, %v816
        %v841 = vsel %vm718, %v840, %v816
        %v842 = vsel %vm717, %v639, %v839
        %v843 = vsel %vm717, 0, %v841
        %v844 = vmul.f32 %v842, %v842
        %v845 = vmul.f32 %v844, -0.001358992
        %v846 = vadd.f32 %v845, 0.041655596
        %v847 = vmul.f32 %v844, %v846
        %v848 = vadd.f32 %v847, -0.4999988
        %v849 = vmul.f32 %v844, %v848
        %v850 = vadd.f32 1.0, %v849
        %v851 = vmul.f32 %v842, %v842
        %v852 = vmul.f32 %v851, -0.00019511016
        %v853 = vadd.f32 %v852, 0.008332121
        %v854 = vmul.f32 %v851, %v853
        %v855 = vadd.f32 %v854, -0.16666654
        %v856 = vmul.f32 %v851, %v855
        %v857 = vadd.f32 %v856, 1.0
        %v858 = vmul.f32 %v857, %v842
        %vm859 = vweird.f32 %v639
        %v860 = vadd.s32 %v843, 3
        %v861 = vand.u32 %v860, 3
        %vm862 = vcmp.lt.s32.totalorder %v861, 2
        %vm863 = vcmp.eq.s32.totalorder %v861, 0
        %v864 = vxor.u32 %v858, 2147483648
        %v865 = vsel %vm863, %v850, %v864
        %vm866 = vcmp.eq.s32.totalorder %v861, 2
        %v867 = vxor.u32 %v850, 2147483648
        %v868 = vsel %vm866, %v867, %v858
        %v869 = vsel %vm862, %v865, %v868
        %v870 = vsel %vm859, nan, %v869
        %v871 = vand.u32 2147483647, %v658
        %vm872 = vcmp.le.f32.partialorder %v871, 0.7853982
        %vm873 = vcmp.lt.s32.totalorder %v658, 0
        %v874 = vand.u32 %v658, 2139095040
        %v875 = vshrl.u32 %v874, 23
        %v876 = vsub.s32 %v875, 127
        %v877 = vand.u32 2147483647, %v658
        %v878 = vand.u32 %v877, 8388607
        %v879 = vor.u32 %v878, 8388608
        %v880 = vsub.s32 0, %v879
        %v881 = vadd.s32 %v876, 1
        %vm882 = vcmp.gt.s32.totalorder %v881, 0
        %v883 = vsel %vm882, %v881, 0
        %v884 = vshrl.u32 %v883, 5
        %v885 = vand.u32 %v883, 31
        %v886 = vsub.s32 32, %v885
        %v887 = vshrl.u32 683565275, %v886
        %v888 = vshll.u32 683565275, %v885
        %v889 = vshrl.u32 2475754826, %v886
        %v890 = vor.u32 %v888, %v889
        %v891 = vshll.u32 2475754826, %v885
        %v892 = vshrl.u32 2131351028, %v886
        %v893 = vor.u32 %v891, %v892
        %v894 = vshll.u32 2131351028, %v885
        %v895 = vshrl.u32 2102212464, %v886
        %v896 = vor.u32 %v894, %v895
        %v897 = vshll.u32 2102212464, %v885
        %v898 = vshrl.u32 920167782, %v886
        %v899 = vor.u32 %v897, %v898
        %v900 = vshll.u32 920167782, %v885
        %v901 = vshrl.u32 1326507024, %v886
        %v902 = vor.u32 %v900, %v901
        %vm903 = vcmp.lt.s32.totalorder %v884, 1
        %vm904 = vcmp.lt.s32.totalorder %v884, 2
        %vm905 = vcmp.lt.s32.totalorder %v884, 3
        %vm906 = vcmp.lt.s32.totalorder %v884, 4
        %v907 = vsel %vm903, %v887, %v890
        %v908 = vsel %vm906, %v896, 2102212464
        %v909 = vsel %vm905, %v893, %v908
        %v910 = vsel %vm904, %v907, %v909
        %v911 = vsel %vm903, %v890, %v893
        %v912 = vsel %vm906, %v899, 920167782
        %v913 = vsel %vm905, %v896, %v912
        %v914 = vsel %vm904, %v911, %v913
        %v915 = vsel %vm903, %v893, %v896
        %v916 = vsel %vm906, %v902, 1326507024
        %v917 = vsel %vm905, %v899, %v916
        %v918 = vsel %vm904, %v915, %v917
        %v919 = vshll.u32 %v879, 8
        %v920 = vand.u32 %v919, 65535
        %v921 = vshrl.u32 %v919, 16
        %v922 = vand.u32 %v918, 65535
        %v923 = vshrl.u32 %v918, 16
        %v924 = vmul.u32 %v920, %v922
        %v925 = vmul.u32 %v920, %v923
        %v926 = vmul.u32 %v921, %v922
        %v927 = vmul.u32 %v921, %v923
        %v928 = vshll.u32 %v925, 16
        %v929 = vshrl.u32 %v925, 16
        %v930 = vshll.u32 %v926, 16
        %v931 = vshrl.u32 %v926, 16
        %vm932 = vc.u32 %v924, %v928
        %v933 = vsel %vm932, 1, 0
        %v934 = vadd.s32 %v924, %v928
        %v935 = vadd.s32 %v927, %v933
        %vm936 = vc.u32 %v934, %v930
        %v937 = vsel %vm936, 1, 0
        %v938 = vadd.s32 %v934, %v930
        %v939 = vadd.s32 %v935, %v937
        %v940 = vadd.s32 %v939, %v929
        %v941 = vadd.s32 %v940, %v931
        %v942 = vand.u32 %v919, 65535
        %v943 = vshrl.u32 %v919, 16
        %v944 = vand.u32 %v914, 65535
        %v945 = vshrl.u32 %v914, 16
        %v946 = vmul.u32 %v942, %v944
        %v947 = vmul.u32 %v942, %v945
        %v948 = vmul.u32 %v943, %v944
        %v949 = vmul.u32 %v943, %v945
        %v950 = vshll.u32 %v947, 16
        %v951 = vshrl.u32 %v947, 16
        %v952 = vshll.u32 %v948, 16
        %v953 = vshrl.u32 %v948, 16
        %vm954 = vc.u32 %v946, %v950
        %v955 = vsel %vm954, 1, 0
        %v956 = vadd.s32 %v946, %v950
        %v957 = vadd.s32 %v949, %v955
        %vm958 = vc.u32 %v956, %v952
        %v959 = vsel %vm958, 1, 0
        %v960 = vadd.s32 %v956, %v952
        %v961 = vadd.s32 %v957, %v959
        %v962 = vadd.s32 %v961, %v951
        %v963 = vadd.s32 %v962, %v953
        %v964 = vmul.u32 %v919, %v910
        %v965 = vadd.s32 %v941, %v960
        %vm966 = vc.u32 %v941, %v960
        %v967 = vadd.s32 %v963, 1
        %v968 = vsel %vm966, %v967, %v963
        %v969 = vadd.s32 %v964, %v968
        %v970 = vadd.s32 %v969, 536870912
        %v971 = vshrl.u32 %v970, 30
        %v972 = vshll.u32 %v971, 30
        %v973 = vsub.s32 %v969, %v972
        %vm974 = vcmp.lt.s32.totalorder %v973, 0
        %v975 = vsub.s32 0, %v973
        %v976 = vsel %vm974, %v975, %v973
        %v977 = vclz %v976
        %v978 = vsub.s32 %v977, 2
        %vm979 = vcmp.gt.s32.totalorder 0, %v978
        %v980 = vsel %vm979, 0, %v978
        %v981 = vsub.s32 32, %v980
        %v982 = vshll.u32 %v973, %v980
        %v983 = vshrl.u32 %v965, %v981
        %v984 = vor.u32 %v982, %v983
        %v985 = vsub.s32 4294967266, %v980
        %v986 = vadd.s32 %v985, 127
        %v987 = vshll.u32 %v986, 23
        %v988 = vor.u32 4788187, %v987
        %v989 = vand.u32 2147483647, %v988
        %v991 = vcvt.s32.f32 %v984
        %v992 = vmul.f32 %v991, %v989
        %v993 = vxor.u32 %v992, 2147483648
        %v994 = vsel %vm873, %v993, %v992
        %v995 = vsub.s32 4, %v971
        %v996 = vsel %vm873, %v995, %v971
        %v997 = vsel %vm872, %v658, %v994
        %v998 = vsel %vm872, 0, %v996
        %v999 = vmul.f32 %v997, %v997
        %v1000 = vmul.f32 %v999, -0.001358992
        %v1001 = vadd.f32 %v1000, 0.041655596
        %v1002 = vmul.f32 %v999, %v1001
        %v1003 = vadd.f32 %v1002, -0.4999988
        %v1004 = vmul.f32 %v999, %v1003
        %v1005 = vadd.f32 1.0, %v1004
        %v1006 = vmul.f32 %v997, %v997
        %v1007 = vmul.f32 %v1006, -0.00019511016
        %v1008 = vadd.f32 %v1007, 0.008332121
        %v1009 = vmul.f32 %v1006, %v1008
        %v1010 = vadd.f32 %v1009, -0.16666654
        %v1011 = vmul.f32 %v1006, %v1010
        %v1012 = vadd.f32 %v1011, 1.0
        %v1013 = vmul.f32 %v1012, %v997
        %vm1014 = vweird.f32 %v658
        %v1015 = vand.u32 %v998, 3
        %vm1016 = vcmp.lt.s32.totalorder %v1015, 2
        %vm1017 = vcmp.eq.s32.totalorder %v1015, 0
        %v1018 = vxor.u32 %v1013, 2147483648
        %v1019 = vsel %vm1017, %v1005, %v1018
        %vm1020 = vcmp.eq.s32.totalorder %v1015, 2
        %v1021 = vxor.u32 %v1005, 2147483648
        %v1022 = vsel %vm1020, %v1021, %v1013
        %v1023 = vsel %vm1016, %v1019, %v1022
        %v1024 = vsel %vm1014, nan, %v1023
        %v1025 = vxor.u32 %v677, 2147483648
        %v1026 = vmul.f32 %v1025, 1.442695
        %v1027 = vpow.pop %v1026
        %v1028 = vadd.f32 %v1027, 1.0
        %v1029 = vrcp.pop %v1028
        %v1030 = vmul.f32 %v1028, %v1029
        %v1031 = vsub.f32 1.0, %v1030
        %v1032 = vmul.f32 %v1029, %v1031
        %v1033 = vadd.f32 %v1029, %v1032
        %vm1034 = vweird.f32 %v1028
        %vm1035 = vweird.f32 %v1029
        %vm1036 = vmor %vm1034, %vm1035
        %v1037 = vsel %vm1036, %v1029, %v1033
        %v1038 = vand.u32 2147483647, %v1028
        %vm1039 = vcmp.eq.f32.partialorder %v1038, 8.507059e+37
        %v1040 = vand.u32 %v1028, 2147483648
        %v1041 = vor.u32 1.1754944e-38, %v1040
        %v1042 = vsel %vm1039, %v1041, %v1037
        %v1043 = vmul.f32 1.0, %v1042
        %v1044 = vmul.f32 %v696, %v715
        %s1045 = sld [smem:[#allocation8]]
        %v1046 = vstv %s1045
        %v1047 = vmul.f32 %v1046, %v620
        %s1048 = sld [smem:[#allocation8 + $0x80]]
        %v1049 = vstv %s1048
        %v1050 = vmul.f32 %v1049, %v870
        %v1051 = vadd.f32 %v1047, %v1050
        %s1052 = sld [smem:[#allocation8 + $0x100]]
        %v1053 = vstv %s1052
        %v1054 = vmul.f32 %v1053, %v1024
        %v1055 = vadd.f32 %v1051, %v1054
        %s1056 = sld [smem:[#allocation8 + $0x180]]
        %v1057 = vstv %s1056
        %v1058 = vmul.f32 %v1057, %v1043
        %v1059 = vadd.f32 %v1055, %v1058
        %s1060 = sld [smem:[#allocation8 + $0x200]]
        %v1061 = vstv %s1060
        %v1062 = vmul.f32 %v1061, %v1044
        %v1063 = vadd.f32 %v1059, %v1062
        %1064 = vst [vmem:[%s253] sm:$0xff] %v1063
        %s1065 = sand.u32 %s120, 1
        %s1066 = scalar_lea.sflag [#allocation4], %s1065
        %s1067 = sand.u32 %s120, 1
        %s1068 = smul.addr %s1067, 8
        %s1069 = scalar_lea.vmem [#allocation10], %s1068
        // Predicated region
        $region53: #{tpu_custom_call.1} parent=35 // pred_check
          %p1070 = pneg %p130
        $region54: #{tpu_custom_call.1} parent=35 // pred_check_branch
          %1072 = sbr.rel (%p1070) target = $region56
        $region55: #{tpu_custom_call.1} parent=35 // pred_region
          %1074 = vsyncadd %s1066, 0
          %s1075 = smul.addr %s23, 8
          %s1076 = scalar_lea.hbm %s4, %s1075
          %s1078 = sshll.u32 %s1069, 4
          %s1079 = int_to_ptr.vmem [resolvable:$true] %s1078
          %s1080 = sshll.u32 %s1076, 4
          %s1081 = int_to_ptr.hbm [resolvable:$true] %s1080
          %1083 = dma.vmem_to_hbm [thread:$0]  %s1079, 128, %s1081, %s1066
        $region56: #{tpu_custom_call.1} parent=35 // pred_fallthru
          _
      $region36: #{tpu_custom_call.1} parent=5 // pred_fallthru
        _
      %p1084 = scmp.le.s32.totalorder 2, %s18
      // Predicated region
      $region57: #{tpu_custom_call.1} parent=5 // pred_check
        %p1085 = pneg %p1084
      $region58: #{tpu_custom_call.1} parent=5 // pred_check_branch
        %1087 = sbr.rel (%p1085) target = $region60
      $region59: #{tpu_custom_call.1} parent=5 // pred_region
        %s1088 = ssub.s32 %s18, 2
        // Predicated region
        $region61: #{tpu_custom_call.1} parent=59 // pred_check
          %p1089 = pneg %p136
        $region62: #{tpu_custom_call.1} parent=59 // pred_check_branch
          %1091 = sbr.rel (%p1089) target = $region64
        $region63: #{tpu_custom_call.1} parent=59 // pred_region
          %s1092 = sand.u32 %s121, 1
          %s1093 = scalar_lea.sflag [#allocation4], %s1092
          %s1094 = sand.u32 %s121, 1
          %s1095 = smul.addr %s1094, 8
          %s1096 = scalar_lea.vmem [#allocation10], %s1095
          %1098 = dma.done %s1093, 128
        $region64: #{tpu_custom_call.1} parent=59 // pred_fallthru
          _
      $region60: #{tpu_custom_call.1} parent=5 // pred_fallthru
        _
    $region6: #{tpu_custom_call.1} parent=1 // loop_footer
      %s22 = sadd.s32 1, %s18
    $region7: #{tpu_custom_call.1} parent=1 // loop_footer_branch
      %17 = sbr.rel target = $region3
    $region8: #{tpu_custom_call.1} parent=1 // loop_exit
      _
    %1099 = vsyncpa [#allocation3], 1
    %s1100 = scalar_lea.sflag [#allocation3], 1
    %1101 = vsyncpa %s1100, 1
    %1102 = vsyncpa [#allocation4], 1
    %s1103 = scalar_lea.sflag [#allocation4], 1
    %1104 = vsyncpa %s1103, 1
    %1105 = vsyncpa [#allocation5], 1
    %s1106 = scalar_lea.sflag [#allocation5], 1
    %1107 = vsyncpa %s1106, 1
    %1108 = vsyncpa [#allocation7], 1

</llo_original>
